<compile_context>
chip_gen: v5e
topology: v5e:2x2
jax: 0.10.0
libtpu: 0.0.40
codegen_flags: <defaults>
</compile_context>

<pallas_src>
import functools

import jax
import jax.numpy as jnp
from jax import lax
from jax.experimental import pallas as pl
from jax.experimental.pallas import tpu as pltpu

LAMBDA_SIM = 1.0
LAMBDA_QUANT = 0.5
LAMBDA_BALANCE = 0.1
MARGIN = 1.0  # parity with the PyTorch module __init__ (unused in its forward)


def _screen_hash_loss_kernel(logits_ref, bh_row_ref, bh_col_ref, labels_ref,
                             out_ref, acc_ref, colsum_ref, *,
                             batch, dim, use_bf16_matmul):
    i = pl.program_id(0)
    j = pl.program_id(1)
    ni = pl.num_programs(0)
    nj = pl.num_programs(1)

    @pl.when(jnp.logical_and(i == 0, j == 0))
    def _init():
        acc_ref[0] = 0.0                      # hinge (sim) sum
        acc_ref[1] = 0.0                      # off-diagonal positive-pair count
        acc_ref[2] = 0.0                      # sum |abs(logits) - 1|
        colsum_ref[...] = jnp.zeros_like(colsum_ref)

    bh_i = bh_row_ref[...].astype(jnp.float32)          # (TB, D)

    # Row-tile-only terms (quantization + balance partial sums), once per i.
    @pl.when(j == 0)
    def _row_terms():
        logits = logits_ref[...].astype(jnp.float32)    # (TB, D)
        acc_ref[2] += jnp.sum(jnp.abs(jnp.abs(logits) - 1.0))
        colsum_ref[...] += jnp.sum(bh_i, axis=0, keepdims=True)

    bh_j = bh_col_ref[...].astype(jnp.float32)          # (TB, D)

    # Gram tile on the MXU.  bf16 operands are the native single-pass MXU path
    # on v5e/v6e/v7x (f32 accumulation via preferred_element_type); the
    # elementwise hinge math below stays in f32.
    if use_bf16_matmul:
        lhs, rhs = bh_i.astype(jnp.bfloat16), bh_j.astype(jnp.bfloat16)
    else:
        lhs, rhs = bh_i, bh_j
    G = lax.dot_general(lhs, rhs, (((1,), (1,)), ((), ())),
                        preferred_element_type=jnp.float32)   # (TB, TB)

    tb = G.shape[0]
    row = lax.broadcasted_iota(jnp.int32, (tb, tb), 0) + i * tb
    col = lax.broadcasted_iota(jnp.int32, (tb, tb), 1) + j * tb
    offdiag = row != col

    # labels may arrive as int8/bool/float; PyTorch semantics: labels[i,j] == 1.
    labels_f = labels_ref[...].astype(jnp.float32)
    is_pos = labels_f == 1.0

    # Fused hinge: select the branch argument, clamp once, square once.
    a = jnp.where(is_pos, 0.9 - G, G + 0.1)
    h = jnp.maximum(a, 0.0)
    acc_ref[0] += jnp.sum(jnp.where(offdiag, h * h, 0.0))
    acc_ref[1] += jnp.sum(jnp.where(jnp.logical_and(is_pos, offdiag), 1.0, 0.0))

    @pl.when(jnp.logical_and(i == ni - 1, j == nj - 1))
    def _finalize():
        sim_sum = acc_ref[0]
        pos_pairs = acc_ref[1]
        total_pairs = jnp.float32(batch * (batch - 1))
        # PyTorch: normalize by (pos + neg) = B*(B-1) only when pos_pairs > 0.
        sim_loss = jnp.where(pos_pairs > 0.0, sim_sum / total_pairs, sim_sum)
        quant_loss = acc_ref[2] / jnp.float32(batch * dim)
        col_mean = colsum_ref[...] * jnp.float32(1.0 / batch)
        balance_loss = jnp.sum(col_mean * col_mean)
        out_ref[0, 0] = (LAMBDA_SIM * sim_loss
                         + LAMBDA_QUANT * quant_loss
                         + LAMBDA_BALANCE * balance_loss)


def _pick_tile(batch):
    # 128-row tiles keep the MXU fed and lane-aligned once B is large; smaller
    # batches fall back to a single tile.
    for cand in (128, 64, 32, 16, 8):
        if batch % cand == 0:
            return cand
    return batch  # TODO(synk): pad ragged batch sizes to a multiple of 8.


def screen_hash_loss(hash_logits, binary_hash, labels, *, use_bf16_matmul=True):
    # TODO(synk): accept class_ids (B,) and build is_pos in-kernel to eliminate
    # the O(B^2) labels HBM stream entirely.
    B, D = binary_hash.shape
    tb = _pick_tile(B)
    nb = B // tb

    kernel = functools.partial(_screen_hash_loss_kernel,
                               batch=B, dim=D,
                               use_bf16_matmul=use_bf16_matmul)

    out = pl.pallas_call(
        kernel,
        out_shape=jax.ShapeDtypeStruct((1, 1), jnp.float32),
        grid_spec=pltpu.PrefetchScalarGridSpec(
            num_scalar_prefetch=0,
            grid=(nb, nb),
            in_specs=[
                pl.BlockSpec((tb, D), lambda i, j: (i, 0)),    # hash_logits rows
                pl.BlockSpec((tb, D), lambda i, j: (i, 0)),    # binary_hash rows
                pl.BlockSpec((tb, D), lambda i, j: (j, 0)),    # binary_hash cols
                pl.BlockSpec((tb, tb), lambda i, j: (i, j)),   # labels tile
            ],
            out_specs=pl.BlockSpec((1, 1), lambda i, j: (0, 0),
                                   memory_space=pltpu.SMEM),
            scratch_shapes=[
                pltpu.SMEM((3,), jnp.float32),     # sim_sum, pos_pairs, quant_sum
                pltpu.VMEM((1, D), jnp.float32),   # per-bit column sums (balance)
            ]),
        compiler_params=pltpu.CompilerParams(
            # The output is a single resident scalar accumulator, so both grid
            # axes are reductions ("arbitrary").
            # TODO(synk): two-stage reduction (per-row-tile partials) would let
            # the row axis be "parallel" and shard across v7x's 2 TensorCores.
            dimension_semantics=("arbitrary", "arbitrary"),
            vmem_limit_bytes=32 * 1024 * 1024,
        ),
    )(hash_logits, binary_hash, binary_hash, labels)
    return out[0, 0]


def screen_hash_loss_ref(hash_logits, binary_hash, labels, *,
                         use_bf16_matmul=True):
    """Plain-JAX reference mirroring the PyTorch loops."""
    B = binary_hash.shape[0]
    logits = hash_logits.astype(jnp.float32)
    bh = binary_hash.astype(jnp.float32)
    lab = labels.astype(jnp.float32)
    if use_bf16_matmul:
        bh16 = bh.astype(jnp.bfloat16)
        G = jnp.dot(bh16, bh16.T, preferred_element_type=jnp.float32)
    else:
        G = jnp.dot(bh, bh.T)
    offdiag = ~jnp.eye(B, dtype=bool)
    is_pos = lab == 1.0
    a = jnp.where(is_pos, 0.9 - G, G + 0.1)
    per_pair = jnp.where(offdiag, jnp.maximum(a, 0.0) ** 2, 0.0)
    sim_sum = jnp.sum(per_pair)
    pos_pairs = jnp.sum(jnp.where(jnp.logical_and(is_pos, offdiag), 1.0, 0.0))
    total_pairs = float(B * (B - 1))
    sim_loss = jnp.where(pos_pairs > 0, sim_sum / total_pairs, sim_sum)
    quant_loss = jnp.mean(jnp.abs(jnp.abs(logits) - 1.0))
    balance_loss = jnp.sum(jnp.mean(bh, axis=0) ** 2)
    return (LAMBDA_SIM * sim_loss + LAMBDA_QUANT * quant_loss
            + LAMBDA_BALANCE * balance_loss)


def _make_inputs(key, batch, dim, n_classes):
    k1, k2 = jax.random.split(key)
    logits = jax.random.normal(k1, (batch, dim), dtype=jnp.float32) * 2.0
    bh = jnp.tanh(logits)
    cls = jax.random.randint(k2, (batch,), 0, n_classes)
    labels = (cls[:, None] == cls[None, :]).astype(jnp.int8)   # binary mask, int8
    return logits, bh, labels


if __name__ == "__main__":
    root = jax.random.PRNGKey(0)
    k_small, k_big = jax.random.split(root)

    # --- small shape (B=8, D=32): single-tile grid ---------------------------
    logits, bh, labels = _make_inputs(k_small, 8, 32, n_classes=3)

    loss_bf16 = jax.block_until_ready(screen_hash_loss(logits, bh, labels))
    ref_bf16 = screen_hash_loss_ref(logits, bh, labels, use_bf16_matmul=True)
    assert jnp.allclose(loss_bf16, ref_bf16, rtol=1e-4, atol=1e-5), (loss_bf16, ref_bf16)

    loss_f32 = jax.block_until_ready(
        screen_hash_loss(logits, bh, labels, use_bf16_matmul=False))
    ref_f32 = screen_hash_loss_ref(logits, bh, labels, use_bf16_matmul=False)
    assert jnp.allclose(loss_f32, ref_f32, rtol=1e-4, atol=1e-5), (loss_f32, ref_f32)

    # --- larger shape (B=256, D=64): exercises the 2x2 tiled grid ------------
    logits2, bh2, labels2 = _make_inputs(k_big, 256, 64, n_classes=8)
    loss2 = jax.block_until_ready(screen_hash_loss(logits2, bh2, labels2))
    ref2 = screen_hash_loss_ref(logits2, bh2, labels2, use_bf16_matmul=True)
    assert jnp.allclose(loss2, ref2, rtol=1e-4, atol=1e-4), (loss2, ref2)

    print("KERNEL_OK")
</pallas_src>

<mosaic_0001>
module attributes {stable_mosaic.version = 11 : i64} {
  func.func @_screen_hash_loss_kernel(%arg0: i32, %arg1: i32, %arg2: memref<8x32xf32, #tpu.memory_space<vmem>>, %arg3: memref<8x32xf32, #tpu.memory_space<vmem>>, %arg4: memref<8x32xf32, #tpu.memory_space<vmem>>, %arg5: memref<8x8xi8, #tpu.memory_space<vmem>>, %arg6: memref<1x1xf32, #tpu.memory_space<smem>>, %arg7: memref<3xf32, #tpu.memory_space<smem>>, %arg8: memref<1x32xf32, #tpu.memory_space<vmem>>) attributes {dimension_semantics = [#tpu.dimension_semantics<arbitrary>, #tpu.dimension_semantics<arbitrary>], iteration_bounds = array<i64: 1, 1>, scalar_prefetch = 0 : i64, scratch_operands = 2 : i64, tpu.core_type = #tpu.core_type<tc>, window_params = [{transform_indices = @transform_0, window_bounds = array<i64: 8, 32>}, {transform_indices = @transform_1, window_bounds = array<i64: 8, 32>}, {transform_indices = @transform_2, window_bounds = array<i64: 8, 32>}, {transform_indices = @transform_3, window_bounds = array<i64: 8, 8>}, {transform_indices = @transform_4, window_bounds = array<i64: 1, 1>}]} {
    %c0_i32 = arith.constant 0 : i32
    %0 = arith.cmpi eq, %arg0, %c0_i32 : i32
    %c0_i32_0 = arith.constant 0 : i32
    %1 = arith.cmpi eq, %arg1, %c0_i32_0 : i32
    %2 = arith.andi %0, %1 : i1
    %3 = arith.extui %2 : i1 to i32
    %c0_i32_1 = arith.constant 0 : i32
    %4 = arith.cmpi ne, %3, %c0_i32_1 : i32
    scf.if %4 {
      %cst_25 = arith.constant 0.000000e+00 : f32
      %c0_26 = arith.constant 0 : index
      %59 = memref.load %arg7[%c0_26] : memref<3xf32, #tpu.memory_space<smem>>
      memref.store %cst_25, %arg7[%c0_26] : memref<3xf32, #tpu.memory_space<smem>>
      %cst_27 = arith.constant 0.000000e+00 : f32
      %c1_28 = arith.constant 1 : index
      %60 = memref.load %arg7[%c1_28] : memref<3xf32, #tpu.memory_space<smem>>
      memref.store %cst_27, %arg7[%c1_28] : memref<3xf32, #tpu.memory_space<smem>>
      %cst_29 = arith.constant 0.000000e+00 : f32
      %c2 = arith.constant 2 : index
      %61 = memref.load %arg7[%c2] : memref<3xf32, #tpu.memory_space<smem>>
      memref.store %cst_29, %arg7[%c2] : memref<3xf32, #tpu.memory_space<smem>>
      %cst_30 = arith.constant 0.000000e+00 : f32
      %62 = vector.broadcast %cst_30 : f32 to vector<1x32xf32>
      %c0_31 = arith.constant 0 : index
      %c0_32 = arith.constant 0 : index
      %63 = vector.load %arg8[%c0_31, %c0_32] : memref<1x32xf32, #tpu.memory_space<vmem>>, vector<1x32xf32>
      tpu.vector_store %arg8[%c0_31, %c0_32], %62 {strides = array<i32>} : memref<1x32xf32, #tpu.memory_space<vmem>>, vector<1x32xf32>,
    } else {
    }
    %c0 = arith.constant 0 : index
    %c0_2 = arith.constant 0 : index
    %5 = vector.load %arg3[%c0, %c0_2] : memref<8x32xf32, #tpu.memory_space<vmem>>, vector<8x32xf32>
    %c0_i32_3 = arith.constant 0 : i32
    %6 = arith.cmpi eq, %arg1, %c0_i32_3 : i32
    %7 = arith.extui %6 : i1 to i32
    %c0_i32_4 = arith.constant 0 : i32
    %8 = arith.cmpi ne, %7, %c0_i32_4 : i32
    scf.if %8 {
      %c0_25 = arith.constant 0 : index
      %c0_26 = arith.constant 0 : index
      %59 = vector.load %arg2[%c0_25, %c0_26] : memref<8x32xf32, #tpu.memory_space<vmem>>, vector<8x32xf32>
      %c2 = arith.constant 2 : index
      %60 = memref.load %arg7[%c2] : memref<3xf32, #tpu.memory_space<smem>>
      %61 = math.absf %59 : vector<8x32xf32>
      %cst_27 = arith.constant 1.000000e+00 : f32
      %62 = vector.broadcast %cst_27 : f32 to vector<8x32xf32>
      %63 = arith.subf %61, %62 : vector<8x32xf32>
      %64 = math.absf %63 : vector<8x32xf32>
      %65 = vector.shape_cast %64 : vector<8x32xf32> to vector<1x8x32xf32>
      %cst_28 = arith.constant dense<0.000000e+00> : vector<1xf32>
      %66 = vector.multi_reduction <add>, %65, %cst_28 [1, 2] : vector<1x8x32xf32> to vector<1xf32>
      %67 = vector.shape_cast %66 : vector<1xf32> to vector<1x1x1xf32>
      %68 = vector.extract %67[0, 0, 0] : f32 from vector<1x1x1xf32>
      %69 = arith.addf %60, %68 : f32
      %c2_29 = arith.constant 2 : index
      %70 = memref.load %arg7[%c2_29] : memref<3xf32, #tpu.memory_space<smem>>
      memref.store %69, %arg7[%c2_29] : memref<3xf32, #tpu.memory_space<smem>>
      %c0_30 = arith.constant 0 : index
      %c0_31 = arith.constant 0 : index
      %71 = vector.load %arg8[%c0_30, %c0_31] : memref<1x32xf32, #tpu.memory_space<vmem>>, vector<1x32xf32>
      %cst_32 = arith.constant dense<0.000000e+00> : vector<32xf32>
      %72 = vector.multi_reduction <add>, %5, %cst_32 [0] : vector<8x32xf32> to vector<32xf32>
      %73 = vector.shape_cast %72 : vector<32xf32> to vector<1x32xf32>
      %74 = arith.addf %71, %73 : vector<1x32xf32>
      %c0_33 = arith.constant 0 : index
      %c0_34 = arith.constant 0 : index
      %75 = vector.load %arg8[%c0_33, %c0_34] : memref<1x32xf32, #tpu.memory_space<vmem>>, vector<1x32xf32>
      tpu.vector_store %arg8[%c0_33, %c0_34], %74 {strides = array<i32>} : memref<1x32xf32, #tpu.memory_space<vmem>>, vector<1x32xf32>,
    } else {
    }
    %c0_5 = arith.constant 0 : index
    %c0_6 = arith.constant 0 : index
    %9 = vector.load %arg4[%c0_5, %c0_6] : memref<8x32xf32, #tpu.memory_space<vmem>>, vector<8x32xf32>
    %10 = arith.truncf %5 : vector<8x32xf32> to vector<8x32xbf16>
    %11 = arith.truncf %9 : vector<8x32xf32> to vector<8x32xbf16>
    %cst = arith.constant dense<0.000000e+00> : vector<8x8xf32>
    %12 = tpu.matmul %10, %11, %cst {dimension_numbers = #tpu.dot_dimension_numbers<[1], [1], [0], [0], [0, 0, 1, 0], [], []>} : vector<8x32xbf16>, vector<8x32xbf16>, vector<8x8xf32> -> vector<8x8xf32>
    %13 = tpu.iota {dimensions = array<i32: 0>} : vector<8x8xi32>
    %c8_i32 = arith.constant 8 : i32
    %14 = arith.muli %arg0, %c8_i32 : i32
    %15 = vector.broadcast %14 : i32 to vector<8x8xi32>
    %16 = arith.addi %13, %15 : vector<8x8xi32>
    %17 = tpu.iota {dimensions = array<i32: 1>} : vector<8x8xi32>
    %c8_i32_7 = arith.constant 8 : i32
    %18 = arith.muli %arg1, %c8_i32_7 : i32
    %19 = vector.broadcast %18 : i32 to vector<8x8xi32>
    %20 = arith.addi %17, %19 : vector<8x8xi32>
    %21 = arith.cmpi ne, %16, %20 : vector<8x8xi32>
    %c0_8 = arith.constant 0 : index
    %c0_9 = arith.constant 0 : index
    %22 = vector.load %arg5[%c0_8, %c0_9] : memref<8x8xi8, #tpu.memory_space<vmem>>, vector<8x8xi8>
    %23 = arith.sitofp %22 : vector<8x8xi8> to vector<8x8xf32>
    %cst_10 = arith.constant 1.000000e+00 : f32
    %24 = vector.broadcast %cst_10 : f32 to vector<8x8xf32>
    %25 = arith.cmpf oeq, %23, %24 : vector<8x8xf32>
    %cst_11 = arith.constant 0.899999976 : f32
    %26 = vector.broadcast %cst_11 : f32 to vector<8x8xf32>
    %27 = arith.subf %26, %12 : vector<8x8xf32>
    %cst_12 = arith.constant 1.000000e-01 : f32
    %28 = vector.broadcast %cst_12 : f32 to vector<8x8xf32>
    %29 = arith.addf %12, %28 : vector<8x8xf32>
    %30 = arith.select %25, %27, %29 : vector<8x8xi1>, vector<8x8xf32>
    %cst_13 = arith.constant 0.000000e+00 : f32
    %31 = vector.broadcast %cst_13 : f32 to vector<8x8xf32>
    %32 = arith.maximumf %30, %31 : vector<8x8xf32>
    %c0_14 = arith.constant 0 : index
    %33 = memref.load %arg7[%c0_14] : memref<3xf32, #tpu.memory_space<smem>>
    %34 = arith.mulf %32, %32 : vector<8x8xf32>
    %cst_15 = arith.constant 0.000000e+00 : f32
    %35 = vector.broadcast %cst_15 : f32 to vector<8x8xf32>
    %36 = arith.select %21, %34, %35 : vector<8x8xi1>, vector<8x8xf32>
    %37 = vector.shape_cast %36 : vector<8x8xf32> to vector<1x8x8xf32>
    %cst_16 = arith.constant dense<0.000000e+00> : vector<1xf32>
    %38 = vector.multi_reduction <add>, %37, %cst_16 [1, 2] : vector<1x8x8xf32> to vector<1xf32>
    %39 = vector.shape_cast %38 : vector<1xf32> to vector<1x1x1xf32>
    %40 = vector.extract %39[0, 0, 0] : f32 from vector<1x1x1xf32>
    %41 = arith.addf %33, %40 : f32
    %c0_17 = arith.constant 0 : index
    %42 = memref.load %arg7[%c0_17] : memref<3xf32, #tpu.memory_space<smem>>
    memref.store %41, %arg7[%c0_17] : memref<3xf32, #tpu.memory_space<smem>>
    %c1 = arith.constant 1 : index
    %43 = memref.load %arg7[%c1] : memref<3xf32, #tpu.memory_space<smem>>
    %44 = arith.andi %25, %21 : vector<8x8xi1>
    %cst_18 = arith.constant 1.000000e+00 : f32
    %cst_19 = arith.constant 0.000000e+00 : f32
    %45 = vector.broadcast %cst_18 : f32 to vector<8x8xf32>
    %46 = vector.broadcast %cst_19 : f32 to vector<8x8xf32>
    %47 = arith.select %44, %45, %46 : vector<8x8xi1>, vector<8x8xf32>
    %48 = vector.shape_cast %47 : vector<8x8xf32> to vector<1x8x8xf32>
    %cst_20 = arith.constant dense<0.000000e+00> : vector<1xf32>
    %49 = vector.multi_reduction <add>, %48, %cst_20 [1, 2] : vector<1x8x8xf32> to vector<1xf32>
    %50 = vector.shape_cast %49 : vector<1xf32> to vector<1x1x1xf32>
    %51 = vector.extract %50[0, 0, 0] : f32 from vector<1x1x1xf32>
    %52 = arith.addf %43, %51 : f32
    %c1_21 = arith.constant 1 : index
    %53 = memref.load %arg7[%c1_21] : memref<3xf32, #tpu.memory_space<smem>>
    memref.store %52, %arg7[%c1_21] : memref<3xf32, #tpu.memory_space<smem>>
    %c0_i32_22 = arith.constant 0 : i32
    %54 = arith.cmpi eq, %arg0, %c0_i32_22 : i32
    %c0_i32_23 = arith.constant 0 : i32
    %55 = arith.cmpi eq, %arg1, %c0_i32_23 : i32
    %56 = arith.andi %54, %55 : i1
    %57 = arith.extui %56 : i1 to i32
    %c0_i32_24 = arith.constant 0 : i32
    %58 = arith.cmpi ne, %57, %c0_i32_24 : i32
    scf.if %58 {
      %c0_25 = arith.constant 0 : index
      %59 = memref.load %arg7[%c0_25] : memref<3xf32, #tpu.memory_space<smem>>
      %c1_26 = arith.constant 1 : index
      %60 = memref.load %arg7[%c1_26] : memref<3xf32, #tpu.memory_space<smem>>
      %cst_27 = arith.constant 0.000000e+00 : f32
      %61 = arith.cmpf ogt, %60, %cst_27 : f32
      %cst_28 = arith.constant 5.600000e+01 : f32
      %62 = arith.divf %59, %cst_28 : f32
      %63 = arith.select %61, %62, %59 : f32
      %c2 = arith.constant 2 : index
      %64 = memref.load %arg7[%c2] : memref<3xf32, #tpu.memory_space<smem>>
      %cst_29 = arith.constant 2.560000e+02 : f32
      %65 = arith.divf %64, %cst_29 : f32
      %c0_30 = arith.constant 0 : index
      %c0_31 = arith.constant 0 : index
      %66 = vector.load %arg8[%c0_30, %c0_31] : memref<1x32xf32, #tpu.memory_space<vmem>>, vector<1x32xf32>
      %cst_32 = arith.constant 1.250000e-01 : f32
      %67 = vector.broadcast %cst_32 : f32 to vector<1x32xf32>
      %68 = arith.mulf %66, %67 : vector<1x32xf32>
      %69 = arith.mulf %68, %68 : vector<1x32xf32>
      %70 = vector.shape_cast %69 : vector<1x32xf32> to vector<1x1x32xf32>
      %cst_33 = arith.constant dense<0.000000e+00> : vector<1xf32>
      %71 = vector.multi_reduction <add>, %70, %cst_33 [1, 2] : vector<1x1x32xf32> to vector<1xf32>
      %72 = vector.shape_cast %71 : vector<1xf32> to vector<1x1x1xf32>
      %73 = vector.extract %72[0, 0, 0] : f32 from vector<1x1x1xf32>
      %cst_34 = arith.constant 1.000000e+00 : f32
      %74 = arith.mulf %cst_34, %63 : f32
      %cst_35 = arith.constant 5.000000e-01 : f32
      %75 = arith.mulf %cst_35, %65 : f32
      %76 = arith.addf %74, %75 : f32
      %cst_36 = arith.constant 1.000000e-01 : f32
      %77 = arith.mulf %cst_36, %73 : f32
      %78 = arith.addf %76, %77 : f32
      %c0_37 = arith.constant 0 : index
      %c0_38 = arith.constant 0 : index
      %79 = memref.load %arg6[%c0_37, %c0_38] : memref<1x1xf32, #tpu.memory_space<smem>>
      memref.store %78, %arg6[%c0_37, %c0_38] : memref<1x1xf32, #tpu.memory_space<smem>>
    } else {
    }
    return
  }
  func.func @transform_0(%arg0: i32, %arg1: i32) -> (i32, i32) {
    %c0_i32 = arith.constant 0 : i32
    %c0_i32_0 = arith.constant 0 : i32
    return %arg0, %c0_i32 : i32, i32
  }
  func.func @transform_1(%arg0: i32, %arg1: i32) -> (i32, i32) {
    %c0_i32 = arith.constant 0 : i32
    %c0_i32_0 = arith.constant 0 : i32
    return %arg0, %c0_i32 : i32, i32
  }
  func.func @transform_2(%arg0: i32, %arg1: i32) -> (i32, i32) {
    %c0_i32 = arith.constant 0 : i32
    %c0_i32_0 = arith.constant 0 : i32
    return %arg1, %c0_i32 : i32, i32
  }
  func.func @transform_3(%arg0: i32, %arg1: i32) -> (i32, i32) {
    %c0_i32 = arith.constant 0 : i32
    return %arg0, %arg1 : i32, i32
  }
  func.func @transform_4(%arg0: i32, %arg1: i32) -> (i32, i32) {
    %c0_i32 = arith.constant 0 : i32
    %c0_i32_0 = arith.constant 0 : i32
    %c0_i32_1 = arith.constant 0 : i32
    return %c0_i32, %c0_i32_0 : i32, i32
  }
}

</mosaic_0001>

<llo_original>
// kernel: tpu_custom_call.1
$region0: #{tpu_custom_call.1}
  #allocation0 [shape = 'u32[]', space=smem, size = 0x4, offset = 0x4, fixed_abs, tag = 'smem constant byte address 0x4 - core index']
  #allocation1 [shape = 'u32[72,128]{1,0:T(1,128)}', space=vmem, size = 0x9000, scoped, tag = 'internal scratch']
  #allocation2 [shape = 'f32[3]{0:T(128)}', space=smem, size = 0x200, scoped, tag = 'scratch operand']
  #allocation3 [shape = 'f32[1,32]{1,0:T(1,128)}', space=vmem, size = 0x200, scoped, tag = 'scratch operand']
  %s0 = inlined_call_operand.hbm [shape: f32[8,32], index: 0, kind: input, shape index: {}]
  %s1 = inlined_call_operand.hbm [shape: f32[8,32], index: 1, kind: input, shape index: {}]
  %s2 = inlined_call_operand.hbm [shape: f32[8,32], index: 2, kind: input, shape index: {}]
  %s3 = inlined_call_operand.vmem [shape: s8[8,8], index: 3, kind: input, shape index: {}]
  %s4 = inlined_call_operand.hbm [shape: f32[1,1], index: 4, kind: output, shape index: {}]
  %s5 = sld [smem:[#allocation0]]
  $region50: #{tpu_custom_call.1} parent=0
    _
  %s7 = ssub.s32 1, %s5
  %s8 = scalar_select 0, %s7, %s5
  $region1: #{tpu_custom_call.1} parent=0
    #allocation4 [shape = 'u8[4096]{0}', space=vmem, size = 0x1000, scoped, tag = 'input window, operand 0, single buffered']
    #allocation5 [shape = 's32[1]{0}', space=sflag, size = 0x4, scoped, tag = 'scoped memory for tpu_custom_call.1']
    #allocation6 [shape = 's32[1]{0}', space=sflag, size = 0x4, scoped, tag = 'scoped memory for tpu_custom_call.1']
    #allocation7 [shape = 'u8[4096]{0}', space=vmem, size = 0x1000, scoped, tag = 'input window, operand 1, single buffered']
    #allocation8 [shape = 's32[1]{0}', space=sflag, size = 0x4, scoped, tag = 'scoped memory for tpu_custom_call.1']
    #allocation9 [shape = 'u8[4096]{0}', space=vmem, size = 0x1000, scoped, tag = 'input window, operand 2, single buffered']
    #allocation10 [shape = 'u8[512]{0}', space=smem, size = 0x200, scoped, tag = 'output window, operand 0, single buffered']
    %9 = vsyncpa [#allocation5], 0
    %10 = vsyncpa [#allocation8], 0
    %11 = vsyncpa [#allocation6], 0
    // Predicated region
    $region2: #{tpu_custom_call.1} parent=1 // pred_check
      _
    $region3: #{tpu_custom_call.1} parent=1 // pred_check_branch
      %13 = sbr.rel (0) target = $region5
    $region4: #{tpu_custom_call.1} parent=1 // pred_region
      %15 = vsyncadd [#allocation5], 0
      %s17 = sshll.u32 %s0, 4
      %s18 = int_to_ptr.hbm [resolvable:$true] %s17
      %s19 = sshll.u32 [#allocation4], 4
      %s20 = int_to_ptr.vmem [resolvable:$true] %s19
      %22 = dma.hbm_to_vmem [thread:$0]  %s18, 128, %s20, [#allocation5]
    $region5: #{tpu_custom_call.1} parent=1 // pred_fallthru
      _
    // Predicated region
    $region6: #{tpu_custom_call.1} parent=1 // pred_check
      _
    $region7: #{tpu_custom_call.1} parent=1 // pred_check_branch
      %24 = sbr.rel (0) target = $region9
    $region8: #{tpu_custom_call.1} parent=1 // pred_region
      %26 = vsyncadd [#allocation8], 0
      %s28 = sshll.u32 %s1, 4
      %s29 = int_to_ptr.hbm [resolvable:$true] %s28
      %s30 = sshll.u32 [#allocation7], 4
      %s31 = int_to_ptr.vmem [resolvable:$true] %s30
      %33 = dma.hbm_to_vmem [thread:$0]  %s29, 128, %s31, [#allocation8]
    $region9: #{tpu_custom_call.1} parent=1 // pred_fallthru
      _
    // Predicated region
    $region10: #{tpu_custom_call.1} parent=1 // pred_check
      _
    $region11: #{tpu_custom_call.1} parent=1 // pred_check_branch
      %35 = sbr.rel (0) target = $region13
    $region12: #{tpu_custom_call.1} parent=1 // pred_region
      %37 = vsyncadd [#allocation8], 0
      %s39 = sshll.u32 %s2, 4
      %s40 = int_to_ptr.hbm [resolvable:$true] %s39
      %s41 = sshll.u32 [#allocation9], 4
      %s42 = int_to_ptr.vmem [resolvable:$true] %s41
      %44 = dma.hbm_to_vmem [thread:$0]  %s40, 128, %s42, [#allocation8]
    $region13: #{tpu_custom_call.1} parent=1 // pred_fallthru
      _
    // Predicated region
    $region14: #{tpu_custom_call.1} parent=1 // pred_check
      _
    $region15: #{tpu_custom_call.1} parent=1 // pred_check_branch
      %46 = sbr.rel (0) target = $region17
    $region16: #{tpu_custom_call.1} parent=1 // pred_region
      _
    $region17: #{tpu_custom_call.1} parent=1 // pred_fallthru
      _
    // Predicated region
    $region18: #{tpu_custom_call.1} parent=1 // pred_check
      _
    $region19: #{tpu_custom_call.1} parent=1 // pred_check_branch
      %48 = sbr.rel (0) target = $region21
    $region20: #{tpu_custom_call.1} parent=1 // pred_region
      %50 = dma.done [#allocation5], 128
    $region21: #{tpu_custom_call.1} parent=1 // pred_fallthru
      _
    // Predicated region
    $region22: #{tpu_custom_call.1} parent=1 // pred_check
      _
    $region23: #{tpu_custom_call.1} parent=1 // pred_check_branch
      %52 = sbr.rel (0) target = $region25
    $region24: #{tpu_custom_call.1} parent=1 // pred_region
      %54 = dma.done [#allocation8], 128
    $region25: #{tpu_custom_call.1} parent=1 // pred_fallthru
      _
    // Predicated region
    $region26: #{tpu_custom_call.1} parent=1 // pred_check
      _
    $region27: #{tpu_custom_call.1} parent=1 // pred_check_branch
      %56 = sbr.rel (0) target = $region29
    $region28: #{tpu_custom_call.1} parent=1 // pred_region
      %58 = dma.done [#allocation8], 128
    $region29: #{tpu_custom_call.1} parent=1 // pred_fallthru
      _
    %p60 = scmp.eq.s32.totalorder 0, 0
    %p61 = scmp.eq.s32.totalorder 0, 0
    %p62 = pnand %p60, %p61
    %p63 = pneg %p62
    // Predicated region
    $region30: #{tpu_custom_call.1} parent=1 // pred_check
      _
    $region31: #{tpu_custom_call.1} parent=1 // pred_check_branch
      %65 = sbr.rel (%p62) target = $region33
    $region32: #{tpu_custom_call.1} parent=1 // pred_region
      %s66 = scalar_lea.smem [#allocation2], 0
      %67 = sst [smem:[%s66]] 0.0
      %s68 = scalar_lea.smem [#allocation2], 1
      %69 = sst [smem:[%s68]] 0.0
      %s70 = scalar_lea.smem [#allocation2], 2
      %71 = sst [smem:[%s70]] 0.0
      %vm72 = vcmask 253952
      %73 = vst.msk [vmem:[#allocation3] sm:$0x1] %vm72, 0.0
    $region33: #{tpu_custom_call.1} parent=1 // pred_fallthru
      _
    %v74 = vld [vmem:[#allocation7] sm:$0xff]
    // Predicated region
    $region34: #{tpu_custom_call.1} parent=1 // pred_check
      %p75 = pneg %p61
    $region35: #{tpu_custom_call.1} parent=1 // pred_check_branch
      %77 = sbr.rel (%p75) target = $region37
    $region36: #{tpu_custom_call.1} parent=1 // pred_region
      %v78 = vld [vmem:[#allocation4] sm:$0xff]
      %s79 = sld [smem:[#allocation2 + $0x2]]
      %v80 = vand.u32 2147483647, %v78
      %v81 = vsub.f32 %v80, 1.0
      %v82 = vand.u32 2147483647, %v81
      %vm83 = vcmask 261120
      %v84 = vsel %vm83, %v82, 0.0
      %85 = vadd.xlane.f32.xlu0 %v84
      %v86 = vpop.xlane.xlu0 %85
      %v87 = vrot.slane %v86, 4
      %v88 = vadd.f32 %v86, %v87
      %v89 = vrot.slane %v88, 2
      %v90 = vadd.f32 %v88, %v89
      %v91 = vrot.slane %v90, 1
      %v92 = vadd.f32 %v90, %v91
      %s93 = vtos %v92
      %s94 = sadd.f32 %s79, %s93
      %s95 = scalar_lea.smem [#allocation2], 2
      %96 = sst [smem:[%s95]] %s94
      %v97 = vld [vmem:[#allocation3] sm:$0x1]
      %v98 = vsel %vm83, %v74, 0.0
      %v99 = vrot.slane %v98, 4
      %v100 = vadd.f32 %v98, %v99
      %v101 = vrot.slane %v100, 2
      %v102 = vadd.f32 %v100, %v101
      %v103 = vrot.slane %v102, 1
      %v104 = vadd.f32 %v102, %v103
      %v105 = vadd.f32 %v97, %v104
      %vm106 = vcmask 253952
      %107 = vst.msk [vmem:[#allocation3] sm:$0x1] %vm106, %v105
    $region37: #{tpu_custom_call.1} parent=1 // pred_fallthru
      _
    %v108 = vld [vmem:[#allocation9] sm:$0xff]
    %v109 = vpack.c.bf16 %v74, %v74
    %v110 = vpack.c.bf16 %v108, %v108
    %vm111 = vcmask 261120
    %v113 = vsel %vm111, %v109, 0
    %v116 = vsel %vm111, %v110, 0
    %118 = vmatpush.bf16.xpose.msra.mxu0 0
    %119 = vmatpush.bf16.xpose.msra.mxu0 0
    %120 = vmatpush.bf16.xpose.msra.mxu0 0
    %121 = vmatpush.bf16.xpose.msra.mxu0 0
    %122 = vmatpush.bf16.xpose.msra.mxu0 0
    %123 = vmatpush.bf16.xpose.msra.mxu0 0
    %124 = vmatpush.bf16.xpose.msra.mxu0 0
    %125 = vmatpush.bf16.xpose.msra.mxu0 %v116
    %126 = vmatmul.bf16.gmra.mxu0 %v113
    %v127 = vpop.f32.mrf.mxu0
    %v128 = vadd.f32 0.0, %v127
    %v129 = vpop.f32.mrf.mxu0
    %130 = vdwg.mxu0
    %v131 = vlaneseq
    %v132 = vshrl.u32 %v131, 7
    %s133 = smul.u32 0, 8
    %v134 = vstv %s133
    %v135 = vadd.s32 %v132, %v134
    %v136 = vlaneseq
    %v137 = vand.u32 %v136, 127
    %s138 = smul.u32 0, 8
    %v139 = vstv %s138
    %v140 = vadd.s32 %v137, %v139
    %vm141 = vcmp.ne.s32.totalorder %v135, %v140
    %v142 = vld [vmem:[%s3] sm:$0x3]
    %v143 = vunpack.c.0.s8 %v142
    %v144 = vcvt.s32.f32 %v143
    %vm145 = vcmp.eq.f32.partialorder %v144, 1.0
    %v146 = vsub.f32 0.9, %v128
    %v147 = vadd.f32 %v128, 0.1
    %v148 = vsel %vm145, %v146, %v147
    %v149 = vmax.f32 %v148, 0.0
    %s150 = sld [smem:[#allocation2]]
    %v151 = vmul.f32 %v149, %v149
    %v152 = vsel %vm141, %v151, 0.0
    %vm153 = vcmask 64512
    %v154 = vsel %vm153, %v152, 0.0
    %155 = vadd.xlane.f32.xlu0 %v154
    %v156 = vpop.xlane.xlu0 %155
    %v157 = vrot.slane %v156, 4
    %v158 = vadd.f32 %v156, %v157
    %v159 = vrot.slane %v158, 2
    %v160 = vadd.f32 %v158, %v159
    %v161 = vrot.slane %v160, 1
    %v162 = vadd.f32 %v160, %v161
    %s163 = vtos %v162
    %s164 = sadd.f32 %s150, %s163
    %s165 = scalar_lea.smem [#allocation2], 0
    %166 = sst [smem:[%s165]] %s164
    %s167 = sld [smem:[#allocation2 + $0x1]]
    %vm168 = vmand %vm145, %vm141
    %v169 = vsel %vm168, 1.0, 0.0
    %v170 = vsel %vm153, %v169, 0.0
    %171 = vadd.xlane.f32.xlu0 %v170
    %v172 = vpop.xlane.xlu0 %171
    %v173 = vrot.slane %v172, 4
    %v174 = vadd.f32 %v172, %v173
    %v175 = vrot.slane %v174, 2
    %v176 = vadd.f32 %v174, %v175
    %v177 = vrot.slane %v176, 1
    %v178 = vadd.f32 %v176, %v177
    %s179 = vtos %v178
    %s180 = sadd.f32 %s167, %s179
    %s181 = scalar_lea.smem [#allocation2], 1
    %182 = sst [smem:[%s181]] %s180
    // Predicated region
    $region38: #{tpu_custom_call.1} parent=1 // pred_check
      _
    $region39: #{tpu_custom_call.1} parent=1 // pred_check_branch
      %184 = sbr.rel (%p62) target = $region41
    $region40: #{tpu_custom_call.1} parent=1 // pred_region
      %s185 = sld [smem:[#allocation2]]
      %s186 = sld [smem:[#allocation2 + $0x1]]
      %p187 = scmp.gt.f32.partialorder %s186, 0.0
      %v188 = vrcp.pop 56.0
      %v189 = vmul.f32 56.0, %v188
      %v190 = vsub.f32 1.0, %v189
      %v191 = vmul.f32 %v188, %v190
      %v192 = vadd.f32 %v188, %v191
      %vm193 = vweird.f32 %v188
      %v194 = vsel %vm193, %v188, %v192
      %s195 = vtos %v194
      %s196 = smul.f32 %s185, %s195
      %s197 = scalar_select %p187, %s196, %s185
      %s198 = sld [smem:[#allocation2 + $0x2]]
      %v199 = vrcp.pop 256.0
      %v200 = vmul.f32 256.0, %v199
      %v201 = vsub.f32 1.0, %v200
      %v202 = vmul.f32 %v199, %v201
      %v203 = vadd.f32 %v199, %v202
      %vm204 = vweird.f32 %v199
      %v205 = vsel %vm204, %v199, %v203
      %s206 = vtos %v205
      %s207 = smul.f32 %s198, %s206
      %v208 = vld [vmem:[#allocation3] sm:$0x1]
      %v209 = vmul.f32 %v208, 0.125
      %v210 = vmul.f32 %v209, %v209
      %vm211 = vcmask 253952
      %v212 = vsel %vm211, %v210, 0.0
      %213 = vadd.xlane.f32.xlu0 %v212
      %v214 = vpop.xlane.xlu0 %213
      %v215 = vrot.slane %v214, 4
      %v216 = vadd.f32 %v214, %v215
      %v217 = vrot.slane %v216, 2
      %v218 = vadd.f32 %v216, %v217
      %v219 = vrot.slane %v218, 1
      %v220 = vadd.f32 %v218, %v219
      %s221 = vtos %v220
      %s222 = smul.f32 %s207, 0.5
      %s223 = sadd.f32 %s197, %s222
      %s224 = smul.f32 %s221, 0.1
      %s225 = sadd.f32 %s223, %s224
      %s226 = scalar_lea.smem [#allocation10], 0
      %227 = sst [smem:[%s226]] %s225
    $region41: #{tpu_custom_call.1} parent=1 // pred_fallthru
      _
    // Predicated region
    $region42: #{tpu_custom_call.1} parent=1 // pred_check
      _
    $region43: #{tpu_custom_call.1} parent=1 // pred_check_branch
      %229 = sbr.rel (0) target = $region45
    $region44: #{tpu_custom_call.1} parent=1 // pred_region
      %231 = vsyncadd [#allocation6], 0
      %s233 = sshll.u32 %s4, 4
      %s234 = int_to_ptr.hbm [resolvable:$true] %s233
      %236 = dma.smem_to_hbm [#allocation10], 16, %s234, [#allocation6]
    $region45: #{tpu_custom_call.1} parent=1 // pred_fallthru
      _
    // Predicated region
    $region46: #{tpu_custom_call.1} parent=1 // pred_check
      _
    $region47: #{tpu_custom_call.1} parent=1 // pred_check_branch
      %238 = sbr.rel (0) target = $region49
    $region48: #{tpu_custom_call.1} parent=1 // pred_region
      %240 = dma.done [#allocation6], 16
    $region49: #{tpu_custom_call.1} parent=1 // pred_fallthru
      _
    %241 = sfence
    %242 = vsyncpa [#allocation5], 1
    %243 = vsyncpa [#allocation8], 1
    %244 = vsyncpa [#allocation6], 1

</llo_original>
